<compile_context>
chip_gen: v7x
topology: tpu7x:2x2x1
jax: 0.10.0
libtpu: 0.0.40
codegen_flags: <defaults>
</compile_context>

<pallas_src>
import jax
import jax.numpy as jnp
from jax.experimental import pallas as pl
from jax.experimental.pallas import tpu as pltpu


def _round_up(v, m):
    return (v + m - 1) // m * m


def nlinear_kernel(x_ref, w_ref, cb_ref, o_ref):
    # x_ref : (TM, L)   f32   batch tile (streamed)
    # w_ref : (L, Pp)   bf16  resident, Pp = round_up(P, 128), padded cols are 0
    # cb_ref: (2, Pp)   f32   row 0 = bias (padded 0), row 1 = 1 - colsum(W)
    # o_ref : (TM, Pp)  f32   lane-dense output tile
    x = x_ref[...]
    L = x.shape[-1]
    seq_last = x[:, L - 1:L]                                  # (TM, 1) static slice, f32

    # MXU matmul on bf16 operands, f32 accumulation (HBM-bound, so MXU is free).
    y = jnp.dot(x.astype(jnp.bfloat16), w_ref[...],
                preferred_element_type=jnp.float32)           # (TM, Pp)

    bias = cb_ref[0:1, :]                                     # (1, Pp)
    scale = cb_ref[1:2, :]                                    # (1, Pp) = 1 - colsum(W)

    # (x - s) @ W + b + s == x @ W + (b + s * (1 - colsum(W))); single dense store.
    o_ref[...] = (y + (seq_last * scale + bias)).astype(o_ref.dtype)


def nlinear_forward(x, w_pt, b_pt, *, tm=1024, vmem_limit_bytes=32 * 1024 * 1024):
    """NLinear forward.

    x:    (B, L) float32
    w_pt: (P, L) float32  -- PyTorch nn.Linear weight layout (out_features, in_features)
    b_pt: (P,)   float32
    returns (B, P) float32
    """
    B, L = x.shape
    P = w_pt.shape[0]
    P_pad = _round_up(P, 128)                    # lane-dense output stores

    # ---- one-time parameter prep (outside the kernel, f32) ----
    w_f32 = jnp.transpose(w_pt).astype(jnp.float32)                 # (L, P)
    colsum = jnp.sum(w_f32, axis=0)                                 # (P,) f32 for parity
    w = jnp.zeros((L, P_pad), jnp.bfloat16).at[:, :P].set(w_f32.astype(jnp.bfloat16))
    cb = jnp.zeros((2, P_pad), jnp.float32)
    cb = cb.at[0, :P].set(b_pt.astype(jnp.float32))                 # bias row
    cb = cb.at[1, :P].set(1.0 - colsum)                             # seq_last scale row

    # ---- batch tile: multiple of 8 sublanes, full dim if batch is small ----
    if B <= tm:
        tm_eff = B                               # block == full array dim is always legal
    else:
        tm_eff = max(8, (tm // 8) * 8)
    grid = (pl.cdiv(B, tm_eff),)

    cost = pl.CostEstimate(
        flops=2 * B * L * P_pad,
        transcendentals=0,
        bytes_accessed=(B * L * 4) + (L * P_pad * 2) + (2 * P_pad * 4) + (B * P_pad * 4),
    )

    out_padded = pl.pallas_call(
        nlinear_kernel,
        out_shape=jax.ShapeDtypeStruct((B, P_pad), jnp.float32),
        grid_spec=pltpu.PrefetchScalarGridSpec(
            num_scalar_prefetch=0,
            grid=grid,
            in_specs=[
                pl.BlockSpec((tm_eff, L), lambda i: (i, 0)),        # x: tiled over batch
                pl.BlockSpec((L, P_pad), lambda i: (0, 0)),         # W: resident
                pl.BlockSpec((2, P_pad), lambda i: (0, 0)),         # bias + scale: resident
            ],
            out_specs=pl.BlockSpec((tm_eff, P_pad), lambda i: (i, 0)),
        ),
        compiler_params=pltpu.CompilerParams(
            # Batch tiles are independent -> shard across TensorCores on v7x.
            dimension_semantics=("parallel",),
            vmem_limit_bytes=vmem_limit_bytes,
        ),
        cost_estimate=cost,
    )(x, w, cb)

    return out_padded[:, :P]


if __name__ == "__main__":
    # Small shapes consistent with the module; tm chosen so the batch grid has 2 steps.
    B, input_len, pred_len = 256, 32, 16

    key = jax.random.PRNGKey(0)
    kx, kw, kb = jax.random.split(key, 3)

    # Deterministic parameter init (mimics nn.Linear uniform(-1/sqrt(in), 1/sqrt(in))).
    bound = 1.0 / jnp.sqrt(jnp.float32(input_len))
    w_pt = jax.random.uniform(kw, (pred_len, input_len), jnp.float32, -bound, bound)
    b_pt = jax.random.uniform(kb, (pred_len,), jnp.float32, -bound, bound)

    x = jax.random.normal(kx, (B, input_len), jnp.float32)

    out = nlinear_forward(x, w_pt, b_pt, tm=128)     # grid = (2,), TM = 128
    out = jax.block_until_ready(out)

    # Pure-JAX f32 reference (exact module semantics).
    seq_last = x[:, -1:]
    ref = (x - seq_last) @ w_pt.T + b_pt + seq_last

    assert out.shape == (B, pred_len)
    # bf16 MXU operands -> relaxed tolerance vs the f32 reference.
    assert jnp.allclose(out, ref, atol=3e-2, rtol=3e-2), "mismatch vs reference"

    print("KERNEL_OK")
</pallas_src>

<mosaic_0001>
module attributes {stable_mosaic.version = 11 : i64} {
  func.func @nlinear_kernel(%arg0: i32, %arg1: memref<128x32xf32, #tpu.memory_space<vmem>>, %arg2: memref<32x128xbf16, #tpu.memory_space<vmem>>, %arg3: memref<2x128xf32, #tpu.memory_space<vmem>>, %arg4: memref<128x128xf32, #tpu.memory_space<vmem>>) attributes {dimension_semantics = [#tpu.dimension_semantics<parallel>], iteration_bounds = array<i64: 2>, scalar_prefetch = 0 : i64, scratch_operands = 0 : i64, tpu.core_type = #tpu.core_type<tc>, window_params = [{transform_indices = @transform_0, window_bounds = array<i64: 128, 32>}, {pipeline_mode = #tpu.pipeline_mode<synchronous>, transform_indices = @transform_1, window_bounds = array<i64: 32, 128>}, {pipeline_mode = #tpu.pipeline_mode<synchronous>, transform_indices = @transform_2, window_bounds = array<i64: 2, 128>}, {transform_indices = @transform_3, window_bounds = array<i64: 128, 128>}]} {
    %c0 = arith.constant 0 : index
    %c0_0 = arith.constant 0 : index
    %0 = vector.load %arg1[%c0, %c0_0] : memref<128x32xf32, #tpu.memory_space<vmem>>, vector<128x32xf32>
    %1 = vector.extract_strided_slice %0 {offsets = [0, 31], sizes = [128, 1], strides = [1, 1]} : vector<128x32xf32> to vector<128x1xf32>
    %2 = arith.truncf %0 : vector<128x32xf32> to vector<128x32xbf16>
    %c0_1 = arith.constant 0 : index
    %c0_2 = arith.constant 0 : index
    %3 = vector.load %arg2[%c0_1, %c0_2] : memref<32x128xbf16, #tpu.memory_space<vmem>>, vector<32x128xbf16>
    %cst = arith.constant dense<0.000000e+00> : vector<128x128xf32>
    %4 = tpu.matmul %2, %3, %cst {dimension_numbers = #tpu.dot_dimension_numbers<[1], [0], [0], [1], [0, 0, 1, 1], [], []>} : vector<128x32xbf16>, vector<32x128xbf16>, vector<128x128xf32> -> vector<128x128xf32>
    %c0_3 = arith.constant 0 : index
    %c0_4 = arith.constant 0 : index
    %5 = vector.load %arg3[%c0_3, %c0_4] : memref<2x128xf32, #tpu.memory_space<vmem>>, vector<1x128xf32>
    %c1 = arith.constant 1 : index
    %c0_5 = arith.constant 0 : index
    %6 = vector.load %arg3[%c1, %c0_5] : memref<2x128xf32, #tpu.memory_space<vmem>>, vector<1x128xf32>
    %7 = vector.broadcast %1 : vector<128x1xf32> to vector<128x128xf32>
    %8 = vector.broadcast %6 : vector<1x128xf32> to vector<128x128xf32>
    %9 = arith.mulf %7, %8 : vector<128x128xf32>
    %10 = vector.broadcast %5 : vector<1x128xf32> to vector<128x128xf32>
    %11 = arith.addf %9, %10 : vector<128x128xf32>
    %12 = arith.addf %4, %11 : vector<128x128xf32>
    %c0_6 = arith.constant 0 : index
    %c0_7 = arith.constant 0 : index
    %13 = vector.load %arg4[%c0_6, %c0_7] : memref<128x128xf32, #tpu.memory_space<vmem>>, vector<128x128xf32>
    tpu.vector_store %arg4[%c0_6, %c0_7], %12 {strides = array<i32>} : memref<128x128xf32, #tpu.memory_space<vmem>>, vector<128x128xf32>,
    return
  }
  func.func @transform_0(%arg0: i32) -> (i32, i32) {
    %c0_i32 = arith.constant 0 : i32
    %c0_i32_0 = arith.constant 0 : i32
    return %arg0, %c0_i32 : i32, i32
  }
  func.func @transform_1(%arg0: i32) -> (i32, i32) {
    %c0_i32 = arith.constant 0 : i32
    %c0_i32_0 = arith.constant 0 : i32
    %c0_i32_1 = arith.constant 0 : i32
    return %c0_i32, %c0_i32_0 : i32, i32
  }
  func.func @transform_2(%arg0: i32) -> (i32, i32) {
    %c0_i32 = arith.constant 0 : i32
    %c0_i32_0 = arith.constant 0 : i32
    %c0_i32_1 = arith.constant 0 : i32
    return %c0_i32, %c0_i32_0 : i32, i32
  }
  func.func @transform_3(%arg0: i32) -> (i32, i32) {
    %c0_i32 = arith.constant 0 : i32
    %c0_i32_0 = arith.constant 0 : i32
    return %arg0, %c0_i32 : i32, i32
  }
}

</mosaic_0001>

<llo_original>
// kernel: tpu_custom_call.1
$region0: #{tpu_custom_call.1}
  #allocation0 [shape = 'u32[]', space=smem, size = 0x4, offset = 0x4, fixed_abs, tag = 'smem constant byte address 0x4 - core index']
  #allocation1 [shape = 'u32[144,128]{1,0:T(1,128)}', space=vmem, size = 0x12000, scoped, tag = 'internal scratch']
  %s0 = inlined_call_operand.vmem [shape: f32[256,32], index: 0, kind: input, shape index: {}]
  %s1 = inlined_call_operand.vmem [shape: bf16[32,128], index: 1, kind: input, shape index: {}]
  %s2 = inlined_call_operand.vmem [shape: f32[2,128], index: 2, kind: input, shape index: {}]
  %s3 = inlined_call_operand.hbm [shape: f32[256,128], index: 3, kind: output, shape index: {}]
  %s4 = sld [smem:[#allocation0]]
  $region45: #{tpu_custom_call.1} parent=0
    _
  %s6 = ssub.s32 1, %s4
  %s7 = scalar_select 0, %s6, %s4
  $region1: #{tpu_custom_call.1} parent=0
    #allocation2 [shape = 'u8[131072]{0}', space=vmem, size = 0x20000, scoped, tag = 'output window, operand 0']
    #allocation3 [shape = 's32[2]{0}', space=sflag, size = 0x8, scoped, tag = 'scoped memory for tpu_custom_call.1']
    %8 = vsyncpa [#allocation3], 0
    %s9 = scalar_lea.sflag [#allocation3], 1
    %10 = vsyncpa %s9, 0
    loop: start=0, step=1, limit=4
    $region2: #{tpu_custom_call.1} parent=1 // loop_pre_header
      _
    $region3: #{tpu_custom_call.1} parent=1 // loop_header
      %s12 = sphi 0, %s16
      %p13 = scmp.ge.s32.totalorder %s12, 4
      %s22 = sphi 0, %s24
      %s25 = sphi 0, %s22
      %s26 = sphi 0, %s25
      %s42 = sphi 0, %s26
      %s46 = sphi 0, %s46
      %s48 = sphi 0, %s46
      %s49 = sphi 0, %s48
      %s63 = sphi 0, %s49
      %s67 = sphi 0, %s67
      %s69 = sphi 0, %s67
      %s70 = sphi 0, %s69
      %s84 = sphi 0, %s70
      %s90 = sphi 0, %s92
      %s93 = sphi 0, %s90
      %s94 = sphi 0, %s93
      %s110 = sphi 0, %s94
    $region4: #{tpu_custom_call.1} parent=1 // loop_header_branch
      %15 = sbr.rel (%p13) target = $region8
    $region5: #{tpu_custom_call.1} parent=1 // loop_body
      %s17 = ssub.s32 %s12, 1
      %s18 = ssub.s32 %s12, 2
      %s19 = sadd.s32 %s12, 1
      %s20 = ssub.s32 %s12, %s19
      %p21 = scmp.eq.s32.totalorder %s20, 0
      %s23 = sadd.s32 %s22, 1
      %s24 = scalar_select %p21, %s22, %s23
      %p27 = pneg %p21
      %p28 = scmp.eq.s32.totalorder %s12, 1
      %p29 = por %p27, %p28
      %p30 = scmp.ne.s32.totalorder %s22, %s25
      %p31 = scmp.eq.s32.totalorder %s12, 0
      %p32 = por %p30, %p31
      %p33 = scmp.ne.s32.totalorder %s22, %s25
      %p34 = scmp.eq.s32.totalorder %s17, 1
      %p35 = por %p33, %p34
      %p36 = scmp.ne.s32.totalorder %s25, %s26
      %p37 = scmp.eq.s32.totalorder %s17, 0
      %p38 = por %p36, %p37
      %p39 = scmp.ne.s32.totalorder %s25, %s26
      %p40 = scmp.eq.s32.totalorder %s18, 1
      %p41 = por %p39, %p40
      %p43 = scmp.ne.s32.totalorder %s26, %s42
      %p44 = scmp.eq.s32.totalorder %s18, 0
      %p45 = por %p43, %p44
      %s47 = sadd.s32 %s46, 1
      %p50 = scmp.eq.s32.totalorder %s12, 1
      %p51 = scmp.ne.s32.totalorder %s46, %s48
      %p52 = scmp.eq.s32.totalorder %s12, 0
      %p53 = por %p51, %p52
      %p54 = scmp.ne.s32.totalorder %s46, %s48
      %p55 = scmp.eq.s32.totalorder %s17, 1
      %p56 = por %p54, %p55
      %p57 = scmp.ne.s32.totalorder %s48, %s49
      %p58 = scmp.eq.s32.totalorder %s17, 0
      %p59 = por %p57, %p58
      %p60 = scmp.ne.s32.totalorder %s48, %s49
      %p61 = scmp.eq.s32.totalorder %s18, 1
      %p62 = por %p60, %p61
      %p64 = scmp.ne.s32.totalorder %s49, %s63
      %p65 = scmp.eq.s32.totalorder %s18, 0
      %p66 = por %p64, %p65
      %s68 = sadd.s32 %s67, 1
      %p71 = scmp.eq.s32.totalorder %s12, 1
      %p72 = scmp.ne.s32.totalorder %s67, %s69
      %p73 = scmp.eq.s32.totalorder %s12, 0
      %p74 = por %p72, %p73
      %p75 = scmp.ne.s32.totalorder %s67, %s69
      %p76 = scmp.eq.s32.totalorder %s17, 1
      %p77 = por %p75, %p76
      %p78 = scmp.ne.s32.totalorder %s69, %s70
      %p79 = scmp.eq.s32.totalorder %s17, 0
      %p80 = por %p78, %p79
      %p81 = scmp.ne.s32.totalorder %s69, %s70
      %p82 = scmp.eq.s32.totalorder %s18, 1
      %p83 = por %p81, %p82
      %p85 = scmp.ne.s32.totalorder %s70, %s84
      %p86 = scmp.eq.s32.totalorder %s18, 0
      %p87 = por %p85, %p86
      %s88 = ssub.s32 %s12, %s19
      %p89 = scmp.eq.s32.totalorder %s88, 0
      %s91 = sadd.s32 %s90, 1
      %s92 = scalar_select %p89, %s90, %s91
      %p95 = pneg %p89
      %p96 = scmp.eq.s32.totalorder %s12, 1
      %p97 = por %p95, %p96
      %p98 = scmp.ne.s32.totalorder %s90, %s93
      %p99 = scmp.eq.s32.totalorder %s12, 0
      %p100 = por %p98, %p99
      %p101 = scmp.ne.s32.totalorder %s90, %s93
      %p102 = scmp.eq.s32.totalorder %s17, 1
      %p103 = por %p101, %p102
      %p104 = scmp.ne.s32.totalorder %s93, %s94
      %p105 = scmp.eq.s32.totalorder %s17, 0
      %p106 = por %p104, %p105
      %p107 = scmp.ne.s32.totalorder %s93, %s94
      %p108 = scmp.eq.s32.totalorder %s18, 1
      %p109 = por %p107, %p108
      %p111 = scmp.ne.s32.totalorder %s94, %s110
      %p112 = scmp.eq.s32.totalorder %s18, 0
      %p113 = por %p111, %p112
      %p114 = scmp.le.s32.totalorder 1, %s12
      %p115 = scmp.lt.s32.totalorder %s12, 3
      %p116 = pnand %p114, %p115
      %p117 = pneg %p116
      // Predicated region
      $region9: #{tpu_custom_call.1} parent=5 // pred_check
        _
      $region10: #{tpu_custom_call.1} parent=5 // pred_check_branch
        %119 = sbr.rel (%p116) target = $region12
      $region11: #{tpu_custom_call.1} parent=5 // pred_region
        %s120 = ssub.s32 %s12, 1
        // Predicated region
        $region13: #{tpu_custom_call.1} parent=11 // pred_check
          %p121 = pneg %p59
        $region14: #{tpu_custom_call.1} parent=11 // pred_check_branch
          %123 = sbr.rel (%p121) target = $region16
        $region15: #{tpu_custom_call.1} parent=11 // pred_region
          _
        $region16: #{tpu_custom_call.1} parent=11 // pred_fallthru
          _
        // Predicated region
        $region17: #{tpu_custom_call.1} parent=11 // pred_check
          %p124 = pneg %p80
        $region18: #{tpu_custom_call.1} parent=11 // pred_check_branch
          %126 = sbr.rel (%p124) target = $region20
        $region19: #{tpu_custom_call.1} parent=11 // pred_region
          _
        $region20: #{tpu_custom_call.1} parent=11 // pred_fallthru
          _
      $region12: #{tpu_custom_call.1} parent=5 // pred_fallthru
        _
      %p127 = scmp.lt.s32.totalorder %s12, 2
      // Predicated region
      $region21: #{tpu_custom_call.1} parent=5 // pred_check
        %p128 = pneg %p127
      $region22: #{tpu_custom_call.1} parent=5 // pred_check_branch
        %130 = sbr.rel (%p128) target = $region24
      $region23: #{tpu_custom_call.1} parent=5 // pred_region
        // Predicated region
        $region25: #{tpu_custom_call.1} parent=23 // pred_check
          %p131 = pneg %p32
        $region26: #{tpu_custom_call.1} parent=23 // pred_check_branch
          %133 = sbr.rel (%p131) target = $region28
        $region27: #{tpu_custom_call.1} parent=23 // pred_region
          %s134 = smul.u32 16, %s12
          %p135 = scmp.lt.s32.totalorder %s134, 31
          %s136 = scalar_select %p135, %s134, 31
          %s137 = smul.addr %s136, 8
          %s138 = scalar_lea.vmem %s0, %s137
          %s139 = smul.u32 16, %s12
        $region28: #{tpu_custom_call.1} parent=23 // pred_fallthru
          _
      $region24: #{tpu_custom_call.1} parent=5 // pred_fallthru
        _
      %p140 = scmp.le.s32.totalorder 1, %s12
      %p141 = scmp.lt.s32.totalorder %s12, 3
      %p142 = pnand %p140, %p141
      %p143 = pneg %p142
      // Predicated region
      $region29: #{tpu_custom_call.1} parent=5 // pred_check
        _
      $region30: #{tpu_custom_call.1} parent=5 // pred_check_branch
        %145 = sbr.rel (%p142) target = $region32
      $region31: #{tpu_custom_call.1} parent=5 // pred_region
        %s146 = ssub.s32 %s12, 1
        %s147 = smul.u32 16, %s17
        %p148 = scmp.lt.s32.totalorder %s147, 31
        %s149 = scalar_select %p148, %s147, 31
        %s150 = smul.addr %s149, 8
        %s151 = scalar_lea.vmem %s0, %s150
        %p152 = pneg %p38
        %p153 = pneg %p35
        %p154 = pneg %p59
        %p155 = pneg %p56
        %p156 = pneg %p80
        %p157 = pneg %p77
        %p158 = pneg %p106
        %p159 = pneg %p103
        %s160 = sand.u32 %s93, 1
        %s161 = scalar_lea.sflag [#allocation3], %s160
        %s162 = sand.u32 %s93, 1
        %s163 = smul.addr %s162, 128
        %s164 = scalar_lea.vmem [#allocation2], %s163
        %s165 = smul.u32 16, %s17
        %p166 = scmp.lt.s32.totalorder %s165, 31
        %s167 = scalar_select %p166, %s165, 31
        %s168 = smul.addr %s167, 8
        %s169 = scalar_lea.vmem %s0, %s168
        %s170 = smul.u32 16, %s17
        %s171 = smul.u32 16, %s17
        %v173 = vld [vmem:[%s169] sm:$0xff]
        %v174 = vld [vmem:[%s169 + $0x8] sm:$0xff]
        %v175 = vld [vmem:[%s169 + $0x10] sm:$0xff]
        %v176 = vld [vmem:[%s169 + $0x18] sm:$0xff]
        %v177 = vld [vmem:[%s169 + $0x20] sm:$0xff]
        %v178 = vld [vmem:[%s169 + $0x28] sm:$0xff]
        %v179 = vld [vmem:[%s169 + $0x30] sm:$0xff]
        %v180 = vld [vmem:[%s169 + $0x38] sm:$0xff]
        %v181 = vld [vmem:[%s169 + $0x40] sm:$0xff]
        %v182 = vld [vmem:[%s169 + $0x48] sm:$0xff]
        %v183 = vld [vmem:[%s169 + $0x50] sm:$0xff]
        %v184 = vld [vmem:[%s169 + $0x58] sm:$0xff]
        %v185 = vld [vmem:[%s169 + $0x60] sm:$0xff]
        %v186 = vld [vmem:[%s169 + $0x68] sm:$0xff]
        %v187 = vld [vmem:[%s169 + $0x70] sm:$0xff]
        %v188 = vld [vmem:[%s169 + $0x78] sm:$0xff]
        %v189 = vpack.c.bf16 %v174, %v173
        %v190 = vpack.c.bf16 %v176, %v175
        %v191 = vpack.c.bf16 %v178, %v177
        %v192 = vpack.c.bf16 %v180, %v179
        %v193 = vpack.c.bf16 %v182, %v181
        %v194 = vpack.c.bf16 %v184, %v183
        %v195 = vpack.c.bf16 %v186, %v185
        %v196 = vpack.c.bf16 %v188, %v187
        %v197 = vld [vmem:[%s1] sm:$0xf]
        %v198 = vld [vmem:[%s1 + $0x4] sm:$0xf]
        %v199 = vld [vmem:[%s1 + $0x8] sm:$0xf]
        %v200 = vld [vmem:[%s1 + $0xc] sm:$0xf]
        %v201 = vld [vmem:[%s2] sm:$0x1]
        %v202 = vld [vmem:[%s2 + $0x1] sm:$0x1]
        %204 = vset.pattern.permute.xlu0 31
        %205 = vperm.xlu0 %204, %v173
        %v206 = vpop.permute.xlu0 %205
        %209 = vset.pattern.permute.xlu0 31
        %210 = vperm.xlu0 %209, %v174
        %v211 = vpop.permute.xlu0 %210
        %214 = vset.pattern.permute.xlu0 31
        %215 = vperm.xlu0 %214, %v175
        %v216 = vpop.permute.xlu0 %215
        %219 = vset.pattern.permute.xlu0 31
        %220 = vperm.xlu0 %219, %v176
        %v221 = vpop.permute.xlu0 %220
        %224 = vset.pattern.permute.xlu0 31
        %225 = vperm.xlu0 %224, %v177
        %v226 = vpop.permute.xlu0 %225
        %229 = vset.pattern.permute.xlu0 31
        %230 = vperm.xlu0 %229, %v178
        %v231 = vpop.permute.xlu0 %230
        %234 = vset.pattern.permute.xlu0 31
        %235 = vperm.xlu0 %234, %v179
        %v236 = vpop.permute.xlu0 %235
        %239 = vset.pattern.permute.xlu0 31
        %240 = vperm.xlu0 %239, %v180
        %v241 = vpop.permute.xlu0 %240
        %244 = vset.pattern.permute.xlu0 31
        %245 = vperm.xlu0 %244, %v181
        %v246 = vpop.permute.xlu0 %245
        %249 = vset.pattern.permute.xlu0 31
        %250 = vperm.xlu0 %249, %v182
        %v251 = vpop.permute.xlu0 %250
        %254 = vset.pattern.permute.xlu0 31
        %255 = vperm.xlu0 %254, %v183
        %v256 = vpop.permute.xlu0 %255
        %259 = vset.pattern.permute.xlu0 31
        %260 = vperm.xlu0 %259, %v184
        %v261 = vpop.permute.xlu0 %260
        %264 = vset.pattern.permute.xlu0 31
        %265 = vperm.xlu0 %264, %v185
        %v266 = vpop.permute.xlu0 %265
        %269 = vset.pattern.permute.xlu0 31
        %270 = vperm.xlu0 %269, %v186
        %v271 = vpop.permute.xlu0 %270
        %274 = vset.pattern.permute.xlu0 31
        %275 = vperm.xlu0 %274, %v187
        %v276 = vpop.permute.xlu0 %275
        %279 = vset.pattern.permute.xlu0 31
        %280 = vperm.xlu0 %279, %v188
        %v281 = vpop.permute.xlu0 %280
        %v283 = vlaneseq
        %v284 = vshrl.u32 %v283, 7
        %v285 = vsub.s32 0, %v284
        %v286 = vrot.slane %v202, %v285
        %v287 = vmul.f32 %v206, %v286
        %v288 = vmul.f32 %v211, %v286
        %v289 = vmul.f32 %v216, %v286
        %v290 = vmul.f32 %v221, %v286
        %v291 = vmul.f32 %v226, %v286
        %v292 = vmul.f32 %v231, %v286
        %v293 = vmul.f32 %v236, %v286
        %v294 = vmul.f32 %v241, %v286
        %v295 = vmul.f32 %v246, %v286
        %v296 = vmul.f32 %v251, %v286
        %v297 = vmul.f32 %v256, %v286
        %v298 = vmul.f32 %v261, %v286
        %v299 = vmul.f32 %v266, %v286
        %v300 = vmul.f32 %v271, %v286
        %v301 = vmul.f32 %v276, %v286
        %v302 = vmul.f32 %v281, %v286
        %v303 = vlaneseq
        %v304 = vshrl.u32 %v303, 7
        %v305 = vsub.s32 0, %v304
        %v306 = vrot.slane %v201, %v305
        %v307 = vadd.f32 %v287, %v306
        %v308 = vadd.f32 %v288, %v306
        %v309 = vadd.f32 %v289, %v306
        %v310 = vadd.f32 %v290, %v306
        %v311 = vadd.f32 %v291, %v306
        %v312 = vadd.f32 %v292, %v306
        %v313 = vadd.f32 %v293, %v306
        %v314 = vadd.f32 %v294, %v306
        %v315 = vadd.f32 %v295, %v306
        %v316 = vadd.f32 %v296, %v306
        %v317 = vadd.f32 %v297, %v306
        %v318 = vadd.f32 %v298, %v306
        %v319 = vadd.f32 %v299, %v306
        %v320 = vadd.f32 %v300, %v306
        %v321 = vadd.f32 %v301, %v306
        %v322 = vadd.f32 %v302, %v306
        %v327 = vunpack.c.l.b16 %v197
        %v328 = vunpack.c.l.b16 %v198
        %v329 = vunpack.c.l.b16 %v199
        %v330 = vunpack.c.l.b16 %v200
        %v331 = vpack.c.b16 %v328, %v327
        %v332 = vpack.c.b16 %v330, %v329
        %vm335 = vcmask 261120
        %v337 = vsel %vm335, %v189, 0
        %v340 = vsel %vm335, %v190, 0
        %v343 = vsel %vm335, %v191, 0
        %v346 = vsel %vm335, %v192, 0
        %v349 = vsel %vm335, %v193, 0
        %v352 = vsel %vm335, %v194, 0
        %v355 = vsel %vm335, %v195, 0
        %v358 = vsel %vm335, %v196, 0
        %360 = vmatprep.subr.bf16.mxu0 0
        %361 = vmatpush1.bf16.msra.mxu0 %v331
        %362 = vmatprep.subr.bf16.mxu0 0
        %363 = vmatpush1.bf16.msra.mxu0 %v332
        %364 = vmatprep.subr.bf16.mxu0 0
        %365 = vmatpush1.bf16.msra.mxu0 0
        %366 = vmatprep.subr.bf16.mxu0 0
        %367 = vmatpush1.bf16.msra.mxu0 0
        %368 = vmatprep.subr.bf16.mxu0 0
        %369 = vmatpush1.bf16.msra.mxu0 0
        %370 = vmatprep.subr.bf16.mxu0 0
        %371 = vmatpush1.bf16.msra.mxu0 0
        %372 = vmatprep.subr.bf16.mxu0 0
        %373 = vmatpush1.bf16.msra.mxu0 0
        %374 = vmatprep.subr.bf16.mxu0 0
        %375 = vmatpush1.bf16.msra.mxu0 0
        %376 = vmatprep.subr.bf16.mxu0 0
        %377 = vmatpush1.bf16.msra.mxu0 0
        %378 = vmatprep.subr.bf16.mxu0 0
        %379 = vmatpush1.bf16.msra.mxu0 0
        %380 = vmatprep.subr.bf16.mxu0 0
        %381 = vmatpush1.bf16.msra.mxu0 0
        %382 = vmatprep.subr.bf16.mxu0 0
        %383 = vmatpush1.bf16.msra.mxu0 0
        %384 = vmatprep.subr.bf16.mxu0 0
        %385 = vmatpush1.bf16.msra.mxu0 0
        %386 = vmatprep.subr.bf16.mxu0 0
        %387 = vmatpush1.bf16.msra.mxu0 0
        %388 = vmatprep.subr.bf16.mxu0 0
        %389 = vmatpush1.bf16.msra.mxu0 0
        %390 = vmatprep.subr.bf16.mxu0 0
        %391 = vmatpush1.bf16.msra.mxu0 0
        %392 = vmatprep.mubr.bf16.mxu0 0
        %393 = vmatmul.mubr.bf16.gmra.mrb[0].mxu0 %v337
        %v394 = vpop.f32.mrb[0].mxu0
        %v395 = vadd.f32 %v307, %v394
        %v396 = vpop.f32.mrb[0].mxu0
        %v397 = vpop.f32.mrb[0].mxu0
        %v398 = vadd.f32 %v308, %v397
        %v399 = vpop.f32.mrb[0].mxu0
        %400 = vmatprep.mubr.bf16.mxu0 0
        %401 = vmatmul.mubr.bf16.gmra.mrb[0].mxu0 %v340
        %v402 = vpop.f32.mrb[0].mxu0
        %v403 = vadd.f32 %v309, %v402
        %v404 = vpop.f32.mrb[0].mxu0
        %v405 = vpop.f32.mrb[0].mxu0
        %v406 = vadd.f32 %v310, %v405
        %v407 = vpop.f32.mrb[0].mxu0
        %408 = vmatprep.mubr.bf16.mxu0 0
        %409 = vmatmul.mubr.bf16.gmra.mrb[0].mxu0 %v343
        %v410 = vpop.f32.mrb[0].mxu0
        %v411 = vadd.f32 %v311, %v410
        %v412 = vpop.f32.mrb[0].mxu0
        %v413 = vpop.f32.mrb[0].mxu0
        %v414 = vadd.f32 %v312, %v413
        %v415 = vpop.f32.mrb[0].mxu0
        %416 = vmatprep.mubr.bf16.mxu0 0
        %417 = vmatmul.mubr.bf16.gmra.mrb[0].mxu0 %v346
        %v418 = vpop.f32.mrb[0].mxu0
        %v419 = vadd.f32 %v313, %v418
        %v420 = vpop.f32.mrb[0].mxu0
        %v421 = vpop.f32.mrb[0].mxu0
        %v422 = vadd.f32 %v314, %v421
        %v423 = vpop.f32.mrb[0].mxu0
        %424 = vmatprep.mubr.bf16.mxu0 0
        %425 = vmatmul.mubr.bf16.gmra.mrb[0].mxu0 %v349
        %v426 = vpop.f32.mrb[0].mxu0
        %v427 = vadd.f32 %v315, %v426
        %v428 = vpop.f32.mrb[0].mxu0
        %v429 = vpop.f32.mrb[0].mxu0
        %v430 = vadd.f32 %v316, %v429
        %v431 = vpop.f32.mrb[0].mxu0
        %432 = vmatprep.mubr.bf16.mxu0 0
        %433 = vmatmul.mubr.bf16.gmra.mrb[0].mxu0 %v352
        %v434 = vpop.f32.mrb[0].mxu0
        %v435 = vadd.f32 %v317, %v434
        %v436 = vpop.f32.mrb[0].mxu0
        %v437 = vpop.f32.mrb[0].mxu0
        %v438 = vadd.f32 %v318, %v437
        %v439 = vpop.f32.mrb[0].mxu0
        %440 = vmatprep.mubr.bf16.mxu0 0
        %441 = vmatmul.mubr.bf16.gmra.mrb[0].mxu0 %v355
        %v442 = vpop.f32.mrb[0].mxu0
        %v443 = vadd.f32 %v319, %v442
        %v444 = vpop.f32.mrb[0].mxu0
        %v445 = vpop.f32.mrb[0].mxu0
        %v446 = vadd.f32 %v320, %v445
        %v447 = vpop.f32.mrb[0].mxu0
        %448 = vmatprep.mubr.bf16.mxu0 0
        %449 = vmatmul.mubr.bf16.gmra.mrb[0].mxu0 %v358
        %v450 = vpop.f32.mrb[0].mxu0
        %v451 = vadd.f32 %v321, %v450
        %v452 = vpop.f32.mrb[0].mxu0
        %v453 = vpop.f32.mrb[0].mxu0
        %v454 = vadd.f32 %v322, %v453
        %v455 = vpop.f32.mrb[0].mxu0
        %456 = vdwg.mxu0
        %457 = vst [vmem:[%s164] sm:$0xff] %v395
        %458 = vst [vmem:[%s164 + $0x8] sm:$0xff] %v398
        %459 = vst [vmem:[%s164 + $0x10] sm:$0xff] %v403
        %460 = vst [vmem:[%s164 + $0x18] sm:$0xff] %v406
        %461 = vst [vmem:[%s164 + $0x20] sm:$0xff] %v411
        %462 = vst [vmem:[%s164 + $0x28] sm:$0xff] %v414
        %463 = vst [vmem:[%s164 + $0x30] sm:$0xff] %v419
        %464 = vst [vmem:[%s164 + $0x38] sm:$0xff] %v422
        %465 = vst [vmem:[%s164 + $0x40] sm:$0xff] %v427
        %466 = vst [vmem:[%s164 + $0x48] sm:$0xff] %v430
        %467 = vst [vmem:[%s164 + $0x50] sm:$0xff] %v435
        %468 = vst [vmem:[%s164 + $0x58] sm:$0xff] %v438
        %469 = vst [vmem:[%s164 + $0x60] sm:$0xff] %v443
        %470 = vst [vmem:[%s164 + $0x68] sm:$0xff] %v446
        %471 = vst [vmem:[%s164 + $0x70] sm:$0xff] %v451
        %472 = vst [vmem:[%s164 + $0x78] sm:$0xff] %v454
        %s473 = sand.u32 %s93, 1
        %s474 = scalar_lea.sflag [#allocation3], %s473
        %s475 = sand.u32 %s93, 1
        %s476 = smul.addr %s475, 128
        %s477 = scalar_lea.vmem [#allocation2], %s476
        // Predicated region
        $region33: #{tpu_custom_call.1} parent=31 // pred_check
          %p478 = pneg %p103
        $region34: #{tpu_custom_call.1} parent=31 // pred_check_branch
          %480 = sbr.rel (%p478) target = $region36
        $region35: #{tpu_custom_call.1} parent=31 // pred_region
          %s481 = smul.u32 16, %s17
          %s483 = ssub.s32 2048, 2048
          %484 = vsyncadd %s474, %s483
          %s485 = smul.addr %s481, 128
          %s486 = scalar_lea.hbm %s3, %s485
          %s487 = sshll.u32 %s477, 4
          %s488 = int_to_ptr.vmem [resolvable:$true] %s487
          %493 = dma.vmem_to_hbm [thread:$0]  %s488, 2048, %s486, %s474, 128, 128, 8
        $region36: #{tpu_custom_call.1} parent=31 // pred_fallthru
          _
      $region32: #{tpu_custom_call.1} parent=5 // pred_fallthru
        _
      %p494 = scmp.le.s32.totalorder 2, %s12
      // Predicated region
      $region37: #{tpu_custom_call.1} parent=5 // pred_check
        %p495 = pneg %p494
      $region38: #{tpu_custom_call.1} parent=5 // pred_check_branch
        %497 = sbr.rel (%p495) target = $region40
      $region39: #{tpu_custom_call.1} parent=5 // pred_region
        %s498 = ssub.s32 %s12, 2
        // Predicated region
        $region41: #{tpu_custom_call.1} parent=39 // pred_check
          %p499 = pneg %p109
        $region42: #{tpu_custom_call.1} parent=39 // pred_check_branch
          %501 = sbr.rel (%p499) target = $region44
        $region43: #{tpu_custom_call.1} parent=39 // pred_region
          %s502 = sand.u32 %s94, 1
          %s503 = scalar_lea.sflag [#allocation3], %s502
          %s504 = sand.u32 %s94, 1
          %s505 = smul.addr %s504, 128
          %s506 = scalar_lea.vmem [#allocation2], %s505
          %507 = dma.done %s503, 2048
        $region44: #{tpu_custom_call.1} parent=39 // pred_fallthru
          _
      $region40: #{tpu_custom_call.1} parent=5 // pred_fallthru
        _
    $region6: #{tpu_custom_call.1} parent=1 // loop_footer
      %s16 = sadd.s32 1, %s12
    $region7: #{tpu_custom_call.1} parent=1 // loop_footer_branch
      %11 = sbr.rel target = $region3
    $region8: #{tpu_custom_call.1} parent=1 // loop_exit
      _
    %508 = vsyncpa [#allocation3], 1
    %s509 = scalar_lea.sflag [#allocation3], 1
    %510 = vsyncpa %s509, 1

</llo_original>
